<compile_context>
chip_gen: v6e
topology: v6e:2x2x1
jax: 0.10.0
libtpu: 0.0.40
codegen_flags: <defaults>
</compile_context>

<pallas_src>
import functools
import math

import jax
import jax.numpy as jnp
from jax.experimental import pallas as pl
from jax.experimental.pallas import tpu as pltpu


# Keep each x tile at least this big before adding extra grid steps: below this,
# the ~0.35 us/step pipeline overhead outweighs any DMA/compute overlap gain.
_MIN_BLOCK_BYTES = 1 * 1024 * 1024
# Target number of pipelined grid steps (>= 2 also feeds both v7x TensorCores).
_TARGET_STEPS = 4


def _sublanes(dtype) -> int:
    """Sublane rows of one vreg for this dtype (fp32 -> 8, bf16 -> 16, i8 -> 32)."""
    return 8 * max(1, 4 // jnp.dtype(dtype).itemsize)


def _vmem_budgets() -> tuple:
    """(tile working-set budget, vmem_limit_bytes), generation-aware.

    v5e/v6e have 128 MiB physical VMEM -> bigger tiles / fewer steps; v7x has
    only 64 MiB, so stay conservative there (also used as the fallback when the
    hardware query is unavailable).
    """
    try:
        phys = pltpu.get_tpu_info().vmem_capacity_bytes
    except Exception:
        phys = 64 * 1024 * 1024
    if phys >= 128 * 1024 * 1024:                    # v5e / v6e
        return 64 * 1024 * 1024, 96 * 1024 * 1024
    return 32 * 1024 * 1024, 48 * 1024 * 1024        # v7x


def make_positional_encoding(d_model: int, max_len: int,
                             dtype=jnp.float32) -> jnp.ndarray:
    """Replicates PositionalEncoding.__init__: pe of shape (maxLen, 1, dModel).

    Pass dtype=jnp.bfloat16 to cache a low-precision table once at init and keep
    the whole forward pass in bf16 (see keep_input_dtype below).
    """
    assert d_model % 2 == 0, "PositionalEncoding requires an even d_model"
    position = jnp.arange(0, max_len, dtype=jnp.float32)[:, None]          # (maxLen, 1)
    denominator = jnp.exp(
        jnp.arange(0, d_model, 2, dtype=jnp.float32) * (math.log(10000.0) / d_model)
    )                                                                       # (dModel/2,)
    pe = jnp.zeros((max_len, d_model), dtype=jnp.float32)
    pe = pe.at[:, 0::2].set(jnp.sin(position / denominator))
    pe = pe.at[:, 1::2].set(jnp.cos(position / denominator))
    # unsqueeze(0).transpose(0, 1) -> (maxLen, 1, dModel)
    return pe[:, None, :].astype(dtype)


def _pe_add_lane_tiled_kernel(x_ref, pe_ref, o_ref, *, batch: int):
    # Small-batch fast path. x_ref / o_ref: (tT, B*D); pe_ref: (tT, D).
    # Tile pe B times along lanes (pure vreg copies when D % 128 == 0); the add
    # and the output store are then fully lane/sublane dense.
    pe_row = pe_ref[...]
    if batch > 1:
        pe_row = jnp.concatenate([pe_row] * batch, axis=-1)
    o_ref[...] = (x_ref[...] + pe_row).astype(o_ref.dtype)


def _pe_add_bcast_kernel(x_ref, pe_ref, o_ref):
    # General path (B >= one vreg of sublanes). x_ref / o_ref: (tT, B, D);
    # pe_ref: (tT, D), broadcast over the batch (sublane) axis in-kernel.
    pe_b = pe_ref[...][:, None, :]
    o_ref[...] = (x_ref[...] + pe_b).astype(o_ref.dtype)


def _choose_seq_tile(T: int, row_bytes_pipelined: int, row_bytes_x: int,
                     sublane: int, tile_budget: int) -> int:
    """Largest sublane-aligned sequence tile that (a) fits the double-buffered
    VMEM budget and (b) still yields a few balanced grid steps for pipelining
    (and, on v7x, for the 2-TensorCore split of the 'parallel' axis)."""
    tT_cap = max(sublane,
                 (tile_budget // max(row_bytes_pipelined, 1)) // sublane * sublane)
    min_steps_vmem = pl.cdiv(T, tT_cap)
    # Never create steps whose x block would fall below _MIN_BLOCK_BYTES.
    max_useful_steps = max(1, (T * row_bytes_x) // _MIN_BLOCK_BYTES)
    steps = max(min(_TARGET_STEPS, max_useful_steps), min_steps_vmem)
    if steps > 1 and steps % 2:
        steps += 1                       # even, balanced split for v7x's two TCs
    tT = pl.cdiv(pl.cdiv(T, steps), sublane) * sublane
    return min(tT, tT_cap)


def positional_encoding_forward(x: jnp.ndarray, pe: jnp.ndarray, *,
                                donate_x: bool = False,
                                keep_input_dtype: bool = True) -> jnp.ndarray:
    """Forward pass: out = x + pe[:T] broadcast over batch; x is (T, B, D).

    `pe` is the full PyTorch-style (maxLen, 1, D) buffer (a (maxLen, D) table is
    also accepted); it is never sliced per call in the streaming paths — the
    BlockSpec index_map bounds reads to the first ceil(T/tT) row blocks.

    keep_input_dtype=True (default) keeps the output (and the pe read) in
    x.dtype. For bf16 activations this deliberately deviates from strict
    PyTorch type promotion (fp32 output) to avoid doubling HBM writeback in a
    purely bandwidth-bound kernel; set it to False for exact torch semantics.
    """
    if x.ndim != 3:
        raise ValueError(f"expected x of rank 3 (T, B, D), got {x.shape}")
    T, B, D = x.shape
    if pe.ndim == 3:
        max_len, one, d_pe = pe.shape
        if one != 1:
            raise ValueError(f"pe shape {pe.shape} incompatible with (maxLen, 1, D)")
        pe2d = pe.reshape(max_len, d_pe)            # contiguous -> free
    elif pe.ndim == 2:
        max_len, d_pe = pe.shape
        pe2d = pe
    else:
        raise ValueError(f"pe must be rank 2 or 3, got shape {pe.shape}")
    if d_pe != D:
        raise ValueError(f"d_model mismatch: x has {D}, pe has {d_pe}")
    if T > max_len:
        raise ValueError(f"sequence length {T} exceeds positional-encoding maxLen {max_len}")

    if keep_input_dtype:
        out_dtype = x.dtype
    else:
        out_dtype = jnp.result_type(x.dtype, pe2d.dtype)   # strict PyTorch promotion
    pe_dtype = out_dtype if keep_input_dtype else pe2d.dtype
    if pe2d.dtype != pe_dtype:
        pe2d = pe2d.astype(pe_dtype)     # tiny (maxLen x D) cast; cache at init if hot
    if donate_x and out_dtype != x.dtype:
        raise ValueError("donate_x requires the output dtype to equal x.dtype")

    x_it = jnp.dtype(x.dtype).itemsize
    pe_it = jnp.dtype(pe_dtype).itemsize
    out_it = jnp.dtype(out_dtype).itemsize
    sublane = max(_sublanes(x.dtype), _sublanes(out_dtype), _sublanes(pe_dtype))

    # Small-batch fast path: with B below one vreg of sublanes, (B, D) minor
    # tiles would be sublane-padded (2-8x VMEM + masked/strided vld/vst), so
    # fold batch into the lane axis instead — (T, B, D) -> (T, B*D) is a free,
    # contiguous reshape and keeps stores lane-dense (best when D % 128 == 0).
    use_lane_tiled = B < sublane

    # Per-seq-row VMEM cost: double-buffered x/out/pe blocks + the in-kernel
    # broadcast/tile intermediate (~ one output block, counted once).
    row_pipe = 2 * (B * D * (x_it + out_it) + D * pe_it) + B * D * out_it
    row_x = B * D * x_it

    tile_budget, vmem_limit = _vmem_budgets()
    tT = _choose_seq_tile(T, row_pipe, row_x, sublane, tile_budget)

    pe_in = pe2d
    if tT >= T:
        tT = T                            # single step: full-extent blocks are legal
        if T % _sublanes(pe_dtype) != 0 and T != max_len:
            # pe's block leading dim is its sublane dim; a non-aligned tT is only
            # legal when it equals the array extent, so slice once (tiny-T case,
            # negligible extra traffic).
            pe_in = pe2d[:T]
    grid = (pl.cdiv(T, tT),)

    if use_lane_tiled:
        kernel = functools.partial(_pe_add_lane_tiled_kernel, batch=B)
        x_in = x.reshape(T, B * D)
        in_specs = [pl.BlockSpec((tT, B * D), lambda i: (i, 0)),   # x: seq-tiled, dense
                    pl.BlockSpec((tT, D), lambda i: (i, 0))]       # pe: dense 2-D tile
        out_specs = pl.BlockSpec((tT, B * D), lambda i: (i, 0))
        out_shape = jax.ShapeDtypeStruct((T, B * D), out_dtype)
    else:
        kernel = _pe_add_bcast_kernel
        x_in = x
        in_specs = [pl.BlockSpec((tT, B, D), lambda i: (i, 0, 0)),
                    pl.BlockSpec((tT, D), lambda i: (i, 0))]
        out_specs = pl.BlockSpec((tT, B, D), lambda i: (i, 0, 0))
        out_shape = jax.ShapeDtypeStruct((T, B, D), out_dtype)

    out = pl.pallas_call(
        kernel,
        out_shape=out_shape,
        grid=grid,
        in_specs=in_specs,
        out_specs=out_specs,
        input_output_aliases=({0: 0} if donate_x else {}),
        compiler_params=pltpu.CompilerParams(
            dimension_semantics=("parallel",),   # seq tiles shard across v7x's 2 TCs
            vmem_limit_bytes=vmem_limit,
        ),
    )(x_in, pe_in)

    return out.reshape(T, B, D) if use_lane_tiled else out


if __name__ == "__main__":
    # Small shapes consistent with the module: seq=8, batch=2, d_model=32, maxLen=16
    T, B, D, MAX_LEN = 8, 2, 32, 16

    key = jax.random.PRNGKey(0)
    x = jax.random.normal(key, (T, B, D), dtype=jnp.float32)

    pe = make_positional_encoding(d_model=D, max_len=MAX_LEN)   # (16, 1, 32) fp32

    out = positional_encoding_forward(x, pe)
    out = jax.block_until_ready(out)

    # Reference check (pure JAX, mirrors the PyTorch forward exactly).
    ref = x + pe[:T, :, :]
    assert out.shape == (T, B, D)
    assert out.dtype == ref.dtype
    assert jnp.allclose(out, ref, atol=1e-6, rtol=1e-6)

    print("KERNEL_OK")
</pallas_src>

<mosaic_0001>
module attributes {stable_mosaic.version = 11 : i64} {
  func.func @_pe_add_lane_tiled_kernel(%arg0: i32, %arg1: memref<8x64xf32, #tpu.memory_space<vmem>>, %arg2: memref<8x32xf32, #tpu.memory_space<vmem>>, %arg3: memref<8x64xf32, #tpu.memory_space<vmem>>) attributes {dimension_semantics = [#tpu.dimension_semantics<parallel>], iteration_bounds = array<i64: 1>, scalar_prefetch = 0 : i64, scratch_operands = 0 : i64, tpu.core_type = #tpu.core_type<tc>, window_params = [{transform_indices = @transform_0, window_bounds = array<i64: 8, 64>}, {transform_indices = @transform_1, window_bounds = array<i64: 8, 32>}, {transform_indices = @transform_2, window_bounds = array<i64: 8, 64>}]} {
    %c0 = arith.constant 0 : index
    %c0_0 = arith.constant 0 : index
    %0 = vector.load %arg2[%c0, %c0_0] : memref<8x32xf32, #tpu.memory_space<vmem>>, vector<8x32xf32>
    %1 = tpu.concatenate %0, %0 in 1 : vector<8x32xf32>, vector<8x32xf32> -> vector<8x64xf32>
    %c0_1 = arith.constant 0 : index
    %c0_2 = arith.constant 0 : index
    %2 = vector.load %arg1[%c0_1, %c0_2] : memref<8x64xf32, #tpu.memory_space<vmem>>, vector<8x64xf32>
    %3 = arith.addf %2, %1 : vector<8x64xf32>
    %c0_3 = arith.constant 0 : index
    %c0_4 = arith.constant 0 : index
    %4 = vector.load %arg3[%c0_3, %c0_4] : memref<8x64xf32, #tpu.memory_space<vmem>>, vector<8x64xf32>
    tpu.vector_store %arg3[%c0_3, %c0_4], %3 {strides = array<i32>} : memref<8x64xf32, #tpu.memory_space<vmem>>, vector<8x64xf32>,
    return
  }
  func.func @transform_0(%arg0: i32) -> (i32, i32) {
    %c0_i32 = arith.constant 0 : i32
    %c0_i32_0 = arith.constant 0 : i32
    return %arg0, %c0_i32 : i32, i32
  }
  func.func @transform_1(%arg0: i32) -> (i32, i32) {
    %c0_i32 = arith.constant 0 : i32
    %c0_i32_0 = arith.constant 0 : i32
    return %arg0, %c0_i32 : i32, i32
  }
  func.func @transform_2(%arg0: i32) -> (i32, i32) {
    %c0_i32 = arith.constant 0 : i32
    %c0_i32_0 = arith.constant 0 : i32
    return %arg0, %c0_i32 : i32, i32
  }
}

</mosaic_0001>

<llo_original>
// kernel: tpu_custom_call.1
$region0: #{tpu_custom_call.1}
  #allocation0 [shape = 'u32[]', space=smem, size = 0x4, offset = 0x4, fixed_abs, tag = 'smem constant byte address 0x4 - core index']
  #allocation1 [shape = 'u32[144,128]{1,0:T(1,128)}', space=vmem, size = 0x12000, scoped, tag = 'internal scratch']
  %s0 = inlined_call_operand.hbm [shape: f32[8,64], index: 0, kind: input, shape index: {}]
  %s1 = inlined_call_operand.hbm [shape: f32[16,32], index: 1, kind: input, shape index: {}]
  %s2 = inlined_call_operand.hbm [shape: f32[8,64], index: 2, kind: output, shape index: {}]
  %s3 = sld [smem:[#allocation0]]
  $region26: #{tpu_custom_call.1} parent=0
    _
  %s5 = ssub.s32 1, %s3
  %s6 = scalar_select 0, %s5, %s3
  $region1: #{tpu_custom_call.1} parent=0
    #allocation2 [shape = 'u8[4096]{0}', space=vmem, size = 0x1000, scoped, tag = 'input window, operand 0, single buffered']
    #allocation3 [shape = 's32[1]{0}', space=sflag, size = 0x4, scoped, tag = 'scoped memory for tpu_custom_call.1']
    #allocation4 [shape = 's32[1]{0}', space=sflag, size = 0x4, scoped, tag = 'scoped memory for tpu_custom_call.1']
    #allocation5 [shape = 'u8[4096]{0}', space=vmem, size = 0x1000, scoped, tag = 'input window, operand 1, single buffered']
    #allocation6 [shape = 's32[1]{0}', space=sflag, size = 0x4, scoped, tag = 'scoped memory for tpu_custom_call.1']
    #allocation7 [shape = 'u8[4096]{0}', space=vmem, size = 0x1000, scoped, tag = 'output window, operand 0, single buffered']
    %7 = vsyncpa [#allocation3], 0
    %8 = vsyncpa [#allocation6], 0
    %9 = vsyncpa [#allocation4], 0
    // Predicated region
    $region2: #{tpu_custom_call.1} parent=1 // pred_check
      _
    $region3: #{tpu_custom_call.1} parent=1 // pred_check_branch
      %11 = sbr.rel (0) target = $region5
    $region4: #{tpu_custom_call.1} parent=1 // pred_region
      %s13 = ssub.s32 128, 128
      %14 = vsyncadd [#allocation3], %s13
      %s16 = sshll.u32 [#allocation2], 4
      %s17 = int_to_ptr.vmem [resolvable:$true] %s16
      %19 = dma.hbm_to_vmem [thread:$0]  %s0, 128, %s17, [#allocation3]
    $region5: #{tpu_custom_call.1} parent=1 // pred_fallthru
      _
    // Predicated region
    $region6: #{tpu_custom_call.1} parent=1 // pred_check
      _
    $region7: #{tpu_custom_call.1} parent=1 // pred_check_branch
      %21 = sbr.rel (0) target = $region9
    $region8: #{tpu_custom_call.1} parent=1 // pred_region
      %s23 = ssub.s32 128, 128
      %24 = vsyncadd [#allocation6], %s23
      %s26 = sshll.u32 [#allocation5], 4
      %s27 = int_to_ptr.vmem [resolvable:$true] %s26
      %29 = dma.hbm_to_vmem [thread:$0]  %s1, 128, %s27, [#allocation6]
    $region9: #{tpu_custom_call.1} parent=1 // pred_fallthru
      _
    // Predicated region
    $region10: #{tpu_custom_call.1} parent=1 // pred_check
      _
    $region11: #{tpu_custom_call.1} parent=1 // pred_check_branch
      %31 = sbr.rel (0) target = $region13
    $region12: #{tpu_custom_call.1} parent=1 // pred_region
      %32 = dma.done [#allocation3], 128
    $region13: #{tpu_custom_call.1} parent=1 // pred_fallthru
      _
    // Predicated region
    $region14: #{tpu_custom_call.1} parent=1 // pred_check
      _
    $region15: #{tpu_custom_call.1} parent=1 // pred_check_branch
      %34 = sbr.rel (0) target = $region17
    $region16: #{tpu_custom_call.1} parent=1 // pred_region
      %35 = dma.done [#allocation6], 128
    $region17: #{tpu_custom_call.1} parent=1 // pred_fallthru
      _
    %v36 = vld [vmem:[#allocation5] sm:$0xff]
    %38 = vrot.lane.b32.xlu0 %v36, 32
    %v39 = vpop.permute.xlu0 %38
    %vm41 = vcmask 261120
    %v42 = vsel %vm41, %v36, %v39
    %v43 = vld [vmem:[#allocation2] sm:$0xff]
    %v44 = vadd.f32 %v43, %v42
    %vm45 = vcmask 523264
    %46 = vst.msk [vmem:[#allocation7] sm:$0xff] %vm45, %v44
    // Predicated region
    $region18: #{tpu_custom_call.1} parent=1 // pred_check
      _
    $region19: #{tpu_custom_call.1} parent=1 // pred_check_branch
      %48 = sbr.rel (0) target = $region21
    $region20: #{tpu_custom_call.1} parent=1 // pred_region
      %s50 = ssub.s32 128, 128
      %51 = vsyncadd [#allocation4], %s50
      %s53 = sshll.u32 [#allocation7], 4
      %s54 = int_to_ptr.vmem [resolvable:$true] %s53
      %56 = dma.vmem_to_hbm [thread:$0]  %s54, 128, %s2, [#allocation4]
    $region21: #{tpu_custom_call.1} parent=1 // pred_fallthru
      _
    // Predicated region
    $region22: #{tpu_custom_call.1} parent=1 // pred_check
      _
    $region23: #{tpu_custom_call.1} parent=1 // pred_check_branch
      %58 = sbr.rel (0) target = $region25
    $region24: #{tpu_custom_call.1} parent=1 // pred_region
      %59 = dma.done [#allocation4], 128
    $region25: #{tpu_custom_call.1} parent=1 // pred_fallthru
      _
    %60 = vsyncpa [#allocation3], 1
    %61 = vsyncpa [#allocation6], 1
    %62 = vsyncpa [#allocation4], 1

</llo_original>
